<compile_context>
chip_gen: v7x
topology: tpu7x:2x2x1
jax: 0.10.0
libtpu: 0.0.40
codegen_flags: <defaults>
</compile_context>

<pallas_src>
import functools

import jax
import jax.numpy as jnp
from jax.experimental import pallas as pl
from jax.experimental.pallas import tpu as pltpu

BN_EPS = 1e-5
NUM_CLASSES = 2


def _round_up(x, m):
    return (x + m - 1) // m * m


def deepset_kernel(x_ref, w1_ref, b1_ref, w2_ref, b2_ref, w3_ref, b3_ref,
                   w4_ref, b4_ref, wd_ref, bd_ref, out_ref):
    # BatchNorm1d(27) (eval mode) is already folded into (w1, b1) at prep time.
    # TODO(synk): training-mode BatchNorm (batch statistics + running-stat update)
    # is not implemented; this is the inference-mode forward.

    # bf16 x bf16 MXU matmuls, f32 accumulation; elementwise math stays f32 (v5e-safe).
    h = jnp.dot(x_ref[...], w1_ref[...], preferred_element_type=jnp.float32) + b1_ref[...]
    h = jnp.maximum(h, 0.0).astype(jnp.bfloat16)                 # (TM, 64)

    h = jnp.dot(h, w2_ref[...], preferred_element_type=jnp.float32) + b2_ref[...]
    h = jnp.maximum(h, 0.0).astype(jnp.bfloat16)                 # (TM, 32)

    h = jnp.dot(h, w3_ref[...], preferred_element_type=jnp.float32) + b3_ref[...]
    h = jnp.maximum(h, 0.0)                                      # (TM, 32) f32

    # GlobalMaxPooling1D in the reference module is actually a mean over axis=1.
    pooled = jnp.mean(h, axis=1, keepdims=True)                  # (TM, 1)

    # Linear(1, 100) + ReLU : K=1 matmul == broadcasted outer product (VPU only).
    h = jnp.maximum(pooled * w4_ref[...] + b4_ref[...], 0.0)     # (TM, 100) f32

    # Final Linear(100, 2) + Softmax folded into a sigmoid over the logit difference:
    # z = h @ (w5[:,0]-w5[:,1]) + (b5[0]-b5[1]);  p0 = sigmoid(z), p1 = 1 - p0 (exact).
    z = jnp.sum(h * wd_ref[...], axis=1, keepdims=True) + bd_ref[...]   # (TM, 1)
    p0 = pl.reciprocal(1.0 + jnp.exp(-z), approx=True)           # EUP exp + recip
    out_ref[:, 0:1] = p0
    out_ref[:, 1:2] = 1.0 - p0                                   # rows sum to exactly 1


def prep_params(p):
    """Fold eval-mode BN into Linear(27,64), fold softmax->sigmoid, cast matmul weights to bf16."""
    scale = p["gamma"] / jnp.sqrt(p["rvar"] + BN_EPS)            # (1, 27)
    shift = p["beta"] - p["rmean"] * scale                       # (1, 27)
    w1 = (scale.T * p["w1"]).astype(jnp.bfloat16)                # (27, 64)
    b1 = p["b1"] + shift @ p["w1"]                               # (1, 64) f32

    w2 = p["w2"].astype(jnp.bfloat16)
    w3 = p["w3"].astype(jnp.bfloat16)

    # 2-class softmax == sigmoid of the logit difference.
    wd = (p["w5"][:, 0] - p["w5"][:, 1]).reshape(1, -1)          # (1, 100) f32
    bd = (p["b5"][:, 0] - p["b5"][:, 1]).reshape(1, 1)           # (1, 1)   f32

    return (w1, b1, w2, p["b2"], w3, p["b3"], p["w4"], p["b4"], wd, bd)


@functools.partial(jax.jit, static_argnames=("tm",))
def deepset_forward(x, params, *, tm=2048):
    """Batch-tiled forward. Default tm=2048 sits near the HBM roofline knee on v5e/v6e/v7x."""
    n, f = x.shape
    weights = prep_params(params)

    # Tile size: multiple of 16 rows (bf16 sublane tiling), capped at ~half the batch so the
    # grid has >= 2 steps and both v7x TensorCores get work ("parallel" batch axis).
    tm_eff = min(_round_up(tm, 16), _round_up(pl.cdiv(n, 2), 16))
    n_pad = _round_up(n, tm_eff)

    x = x.astype(jnp.bfloat16)                                   # halve the dominant read DMA
    x_pad = jnp.pad(x, ((0, n_pad - n), (0, 0))) if n_pad != n else x

    def resident(w):
        return pl.BlockSpec(w.shape, lambda i: (0, 0))           # VMEM-resident across the grid

    out = pl.pallas_call(
        deepset_kernel,
        out_shape=jax.ShapeDtypeStruct((n_pad, NUM_CLASSES), jnp.float32),
        grid=(n_pad // tm_eff,),
        in_specs=[pl.BlockSpec((tm_eff, f), lambda i: (i, 0))]
                 + [resident(w) for w in weights],
        out_specs=pl.BlockSpec((tm_eff, NUM_CLASSES), lambda i: (i, 0)),
        compiler_params=pltpu.CompilerParams(dimension_semantics=("parallel",)),
    )(x_pad, *weights)

    return out[:n]


def init_params(key):
    """Deterministic parameter init; shapes follow DeepSet.__init__ (W stored as (in, out))."""
    ks = jax.random.split(key, 12)

    def lin(kw, kb, fan_in, fan_out):
        bound = 1.0 / jnp.sqrt(jnp.float32(fan_in))
        w = jax.random.uniform(kw, (fan_in, fan_out), jnp.float32, -bound, bound)
        b = jax.random.uniform(kb, (1, fan_out), jnp.float32, -bound, bound)
        return w, b

    w1, b1 = lin(ks[0], ks[1], 27, 64)
    w2, b2 = lin(ks[2], ks[3], 64, 32)
    w3, b3 = lin(ks[4], ks[5], 32, 32)
    w4, b4 = lin(ks[6], ks[7], 1, 100)
    w5, b5 = lin(ks[8], ks[9], 100, 2)

    gamma = 1.0 + 0.1 * jax.random.normal(ks[10], (1, 27), jnp.float32)
    beta = 0.1 * jax.random.normal(ks[11], (1, 27), jnp.float32)
    rmean = jnp.zeros((1, 27), jnp.float32)
    rvar = jnp.ones((1, 27), jnp.float32)

    return dict(gamma=gamma, beta=beta, rmean=rmean, rvar=rvar,
                w1=w1, b1=b1, w2=w2, b2=b2, w3=w3, b3=b3,
                w4=w4, b4=b4, w5=w5, b5=b5)


def reference_forward(x, p):
    """Plain-JAX f32 reference of the same forward (unfolded params), for a sanity check."""
    h = (x - p["rmean"]) / jnp.sqrt(p["rvar"] + BN_EPS) * p["gamma"] + p["beta"]
    h = jnp.maximum(h @ p["w1"] + p["b1"], 0.0)
    h = jnp.maximum(h @ p["w2"] + p["b2"], 0.0)
    h = jnp.maximum(h @ p["w3"] + p["b3"], 0.0)
    pooled = jnp.mean(h, axis=1, keepdims=True)
    h = jnp.maximum(pooled @ p["w4"] + p["b4"], 0.0)
    logits = h @ p["w5"] + p["b5"]
    return jax.nn.softmax(logits, axis=1)


if __name__ == "__main__":
    key = jax.random.PRNGKey(0)
    k_x, k_x2, k_p = jax.random.split(key, 3)
    params = init_params(k_p)

    # Small batch (single grid step).
    N = 8
    x = jax.random.normal(k_x, (N, 27), jnp.float32)
    out = jax.block_until_ready(deepset_forward(x, params))
    ref = reference_forward(x, params)
    assert out.shape == (N, 2), out.shape
    assert jnp.allclose(jnp.sum(out, axis=1), 1.0, atol=1e-5), "softmax rows must sum to 1"
    assert jnp.allclose(out, ref, atol=2e-2, rtol=2e-2), "mismatch vs JAX reference"

    # Exercise the tiled/padded multi-step grid path (40 rows, tile 16 -> grid of 3).
    N2 = 40
    x2 = jax.random.normal(k_x2, (N2, 27), jnp.float32)
    out2 = jax.block_until_ready(deepset_forward(x2, params, tm=16))
    ref2 = reference_forward(x2, params)
    assert out2.shape == (N2, 2), out2.shape
    assert jnp.allclose(jnp.sum(out2, axis=1), 1.0, atol=1e-5), "softmax rows must sum to 1"
    assert jnp.allclose(out2, ref2, atol=2e-2, rtol=2e-2), "mismatch vs JAX reference (tiled)"

    print("KERNEL_OK")
</pallas_src>

<mosaic_0001>
module attributes {stable_mosaic.version = 11 : i64} {
  func.func @deepset_kernel(%arg0: i32, %arg1: memref<16x27xbf16, #tpu.memory_space<vmem>>, %arg2: memref<27x64xbf16, #tpu.memory_space<vmem>>, %arg3: memref<1x64xf32, #tpu.memory_space<vmem>>, %arg4: memref<64x32xbf16, #tpu.memory_space<vmem>>, %arg5: memref<1x32xf32, #tpu.memory_space<vmem>>, %arg6: memref<32x32xbf16, #tpu.memory_space<vmem>>, %arg7: memref<1x32xf32, #tpu.memory_space<vmem>>, %arg8: memref<1x100xf32, #tpu.memory_space<vmem>>, %arg9: memref<1x100xf32, #tpu.memory_space<vmem>>, %arg10: memref<1x100xf32, #tpu.memory_space<vmem>>, %arg11: memref<1x1xf32, #tpu.memory_space<vmem>>, %arg12: memref<16x2xf32, #tpu.memory_space<vmem>>) attributes {dimension_semantics = [#tpu.dimension_semantics<parallel>], iteration_bounds = array<i64: 1>, scalar_prefetch = 0 : i64, scratch_operands = 0 : i64, tpu.core_type = #tpu.core_type<tc>, window_params = [{transform_indices = @transform_0, window_bounds = array<i64: 16, 27>}, {pipeline_mode = #tpu.pipeline_mode<synchronous>, transform_indices = @transform_1, window_bounds = array<i64: 27, 64>}, {pipeline_mode = #tpu.pipeline_mode<synchronous>, transform_indices = @transform_2, window_bounds = array<i64: 1, 64>}, {pipeline_mode = #tpu.pipeline_mode<synchronous>, transform_indices = @transform_3, window_bounds = array<i64: 64, 32>}, {pipeline_mode = #tpu.pipeline_mode<synchronous>, transform_indices = @transform_4, window_bounds = array<i64: 1, 32>}, {pipeline_mode = #tpu.pipeline_mode<synchronous>, transform_indices = @transform_5, window_bounds = array<i64: 32, 32>}, {pipeline_mode = #tpu.pipeline_mode<synchronous>, transform_indices = @transform_6, window_bounds = array<i64: 1, 32>}, {pipeline_mode = #tpu.pipeline_mode<synchronous>, transform_indices = @transform_7, window_bounds = array<i64: 1, 100>}, {pipeline_mode = #tpu.pipeline_mode<synchronous>, transform_indices = @transform_8, window_bounds = array<i64: 1, 100>}, {pipeline_mode = #tpu.pipeline_mode<synchronous>, transform_indices = @transform_9, window_bounds = array<i64: 1, 100>}, {pipeline_mode = #tpu.pipeline_mode<synchronous>, transform_indices = @transform_10, window_bounds = array<i64: 1, 1>}, {transform_indices = @transform_11, window_bounds = array<i64: 16, 2>}]} {
    %c0 = arith.constant 0 : index
    %c0_0 = arith.constant 0 : index
    %0 = vector.load %arg1[%c0, %c0_0] : memref<16x27xbf16, #tpu.memory_space<vmem>>, vector<16x27xbf16>
    %c0_1 = arith.constant 0 : index
    %c0_2 = arith.constant 0 : index
    %1 = vector.load %arg2[%c0_1, %c0_2] : memref<27x64xbf16, #tpu.memory_space<vmem>>, vector<27x64xbf16>
    %cst = arith.constant dense<0.000000e+00> : vector<16x64xf32>
    %2 = tpu.matmul %0, %1, %cst {dimension_numbers = #tpu.dot_dimension_numbers<[1], [0], [0], [1], [0, 0, 1, 1], [], []>} : vector<16x27xbf16>, vector<27x64xbf16>, vector<16x64xf32> -> vector<16x64xf32>
    %c0_3 = arith.constant 0 : index
    %c0_4 = arith.constant 0 : index
    %3 = vector.load %arg3[%c0_3, %c0_4] : memref<1x64xf32, #tpu.memory_space<vmem>>, vector<1x64xf32>
    %4 = vector.broadcast %3 : vector<1x64xf32> to vector<16x64xf32>
    %5 = arith.addf %2, %4 : vector<16x64xf32>
    %cst_5 = arith.constant 0.000000e+00 : f32
    %6 = vector.broadcast %cst_5 : f32 to vector<16x64xf32>
    %7 = arith.maximumf %5, %6 : vector<16x64xf32>
    %8 = arith.truncf %7 : vector<16x64xf32> to vector<16x64xbf16>
    %c0_6 = arith.constant 0 : index
    %c0_7 = arith.constant 0 : index
    %9 = vector.load %arg4[%c0_6, %c0_7] : memref<64x32xbf16, #tpu.memory_space<vmem>>, vector<64x32xbf16>
    %cst_8 = arith.constant dense<0.000000e+00> : vector<16x32xf32>
    %10 = tpu.matmul %8, %9, %cst_8 {dimension_numbers = #tpu.dot_dimension_numbers<[1], [0], [0], [1], [0, 0, 1, 1], [], []>} : vector<16x64xbf16>, vector<64x32xbf16>, vector<16x32xf32> -> vector<16x32xf32>
    %c0_9 = arith.constant 0 : index
    %c0_10 = arith.constant 0 : index
    %11 = vector.load %arg5[%c0_9, %c0_10] : memref<1x32xf32, #tpu.memory_space<vmem>>, vector<1x32xf32>
    %12 = vector.broadcast %11 : vector<1x32xf32> to vector<16x32xf32>
    %13 = arith.addf %10, %12 : vector<16x32xf32>
    %cst_11 = arith.constant 0.000000e+00 : f32
    %14 = vector.broadcast %cst_11 : f32 to vector<16x32xf32>
    %15 = arith.maximumf %13, %14 : vector<16x32xf32>
    %16 = arith.truncf %15 : vector<16x32xf32> to vector<16x32xbf16>
    %c0_12 = arith.constant 0 : index
    %c0_13 = arith.constant 0 : index
    %17 = vector.load %arg6[%c0_12, %c0_13] : memref<32x32xbf16, #tpu.memory_space<vmem>>, vector<32x32xbf16>
    %cst_14 = arith.constant dense<0.000000e+00> : vector<16x32xf32>
    %18 = tpu.matmul %16, %17, %cst_14 {dimension_numbers = #tpu.dot_dimension_numbers<[1], [0], [0], [1], [0, 0, 1, 1], [], []>} : vector<16x32xbf16>, vector<32x32xbf16>, vector<16x32xf32> -> vector<16x32xf32>
    %c0_15 = arith.constant 0 : index
    %c0_16 = arith.constant 0 : index
    %19 = vector.load %arg7[%c0_15, %c0_16] : memref<1x32xf32, #tpu.memory_space<vmem>>, vector<1x32xf32>
    %20 = vector.broadcast %19 : vector<1x32xf32> to vector<16x32xf32>
    %21 = arith.addf %18, %20 : vector<16x32xf32>
    %cst_17 = arith.constant 0.000000e+00 : f32
    %22 = vector.broadcast %cst_17 : f32 to vector<16x32xf32>
    %23 = arith.maximumf %21, %22 : vector<16x32xf32>
    %cst_18 = arith.constant dense<0.000000e+00> : vector<16xf32>
    %24 = vector.multi_reduction <add>, %23, %cst_18 [1] : vector<16x32xf32> to vector<16xf32>
    %25 = vector.shape_cast %24 : vector<16xf32> to vector<16x1xf32>
    %cst_19 = arith.constant 3.200000e+01 : f32
    %26 = vector.broadcast %cst_19 : f32 to vector<16x1xf32>
    %27 = arith.divf %25, %26 : vector<16x1xf32>
    %c0_20 = arith.constant 0 : index
    %c0_21 = arith.constant 0 : index
    %28 = vector.load %arg8[%c0_20, %c0_21] : memref<1x100xf32, #tpu.memory_space<vmem>>, vector<1x100xf32>
    %29 = vector.broadcast %27 : vector<16x1xf32> to vector<16x100xf32>
    %30 = vector.broadcast %28 : vector<1x100xf32> to vector<16x100xf32>
    %31 = arith.mulf %29, %30 : vector<16x100xf32>
    %c0_22 = arith.constant 0 : index
    %c0_23 = arith.constant 0 : index
    %32 = vector.load %arg9[%c0_22, %c0_23] : memref<1x100xf32, #tpu.memory_space<vmem>>, vector<1x100xf32>
    %33 = vector.broadcast %32 : vector<1x100xf32> to vector<16x100xf32>
    %34 = arith.addf %31, %33 : vector<16x100xf32>
    %cst_24 = arith.constant 0.000000e+00 : f32
    %35 = vector.broadcast %cst_24 : f32 to vector<16x100xf32>
    %36 = arith.maximumf %34, %35 : vector<16x100xf32>
    %c0_25 = arith.constant 0 : index
    %c0_26 = arith.constant 0 : index
    %37 = vector.load %arg10[%c0_25, %c0_26] : memref<1x100xf32, #tpu.memory_space<vmem>>, vector<1x100xf32>
    %38 = vector.broadcast %37 : vector<1x100xf32> to vector<16x100xf32>
    %39 = arith.mulf %36, %38 : vector<16x100xf32>
    %cst_27 = arith.constant dense<0.000000e+00> : vector<16xf32>
    %40 = vector.multi_reduction <add>, %39, %cst_27 [1] : vector<16x100xf32> to vector<16xf32>
    %41 = vector.shape_cast %40 : vector<16xf32> to vector<16x1xf32>
    %c0_28 = arith.constant 0 : index
    %c0_29 = arith.constant 0 : index
    %42 = vector.load %arg11[%c0_28, %c0_29] : memref<1x1xf32, #tpu.memory_space<vmem>>, vector<1x1xf32>
    %43 = vector.broadcast %42 : vector<1x1xf32> to vector<16x1xf32>
    %44 = arith.addf %41, %43 : vector<16x1xf32>
    %cst_30 = arith.constant 0.000000e+00 : f32
    %45 = vector.broadcast %cst_30 : f32 to vector<16x1xf32>
    %46 = arith.subf %45, %44 : vector<16x1xf32>
    %47 = math.exp %46 : vector<16x1xf32>
    %cst_31 = arith.constant 1.000000e+00 : f32
    %48 = vector.broadcast %cst_31 : f32 to vector<16x1xf32>
    %49 = arith.addf %48, %47 : vector<16x1xf32>
    %50 = tpu.reciprocal %49 {approx = true} : vector<16x1xf32> -> vector<16x1xf32>
    %c0_32 = arith.constant 0 : index
    %c0_33 = arith.constant 0 : index
    %51 = vector.load %arg12[%c0_32, %c0_33] : memref<16x2xf32, #tpu.memory_space<vmem>>, vector<16x1xf32>
    tpu.vector_store %arg12[%c0_32, %c0_33], %50 {strides = array<i32>} : memref<16x2xf32, #tpu.memory_space<vmem>>, vector<16x1xf32>,
    %cst_34 = arith.constant 1.000000e+00 : f32
    %52 = vector.broadcast %cst_34 : f32 to vector<16x1xf32>
    %53 = arith.subf %52, %50 : vector<16x1xf32>
    %c0_35 = arith.constant 0 : index
    %c1 = arith.constant 1 : index
    %54 = vector.load %arg12[%c0_35, %c1] : memref<16x2xf32, #tpu.memory_space<vmem>>, vector<16x1xf32>
    tpu.vector_store %arg12[%c0_35, %c1], %53 {strides = array<i32>} : memref<16x2xf32, #tpu.memory_space<vmem>>, vector<16x1xf32>,
    return
  }
  func.func @transform_0(%arg0: i32) -> (i32, i32) {
    %c0_i32 = arith.constant 0 : i32
    %c0_i32_0 = arith.constant 0 : i32
    return %arg0, %c0_i32 : i32, i32
  }
  func.func @transform_1(%arg0: i32) -> (i32, i32) {
    %c0_i32 = arith.constant 0 : i32
    %c0_i32_0 = arith.constant 0 : i32
    %c0_i32_1 = arith.constant 0 : i32
    return %c0_i32, %c0_i32_0 : i32, i32
  }
  func.func @transform_2(%arg0: i32) -> (i32, i32) {
    %c0_i32 = arith.constant 0 : i32
    %c0_i32_0 = arith.constant 0 : i32
    %c0_i32_1 = arith.constant 0 : i32
    return %c0_i32, %c0_i32_0 : i32, i32
  }
  func.func @transform_3(%arg0: i32) -> (i32, i32) {
    %c0_i32 = arith.constant 0 : i32
    %c0_i32_0 = arith.constant 0 : i32
    %c0_i32_1 = arith.constant 0 : i32
    return %c0_i32, %c0_i32_0 : i32, i32
  }
  func.func @transform_4(%arg0: i32) -> (i32, i32) {
    %c0_i32 = arith.constant 0 : i32
    %c0_i32_0 = arith.constant 0 : i32
    %c0_i32_1 = arith.constant 0 : i32
    return %c0_i32, %c0_i32_0 : i32, i32
  }
  func.func @transform_5(%arg0: i32) -> (i32, i32) {
    %c0_i32 = arith.constant 0 : i32
    %c0_i32_0 = arith.constant 0 : i32
    %c0_i32_1 = arith.constant 0 : i32
    return %c0_i32, %c0_i32_0 : i32, i32
  }
  func.func @transform_6(%arg0: i32) -> (i32, i32) {
    %c0_i32 = arith.constant 0 : i32
    %c0_i32_0 = arith.constant 0 : i32
    %c0_i32_1 = arith.constant 0 : i32
    return %c0_i32, %c0_i32_0 : i32, i32
  }
  func.func @transform_7(%arg0: i32) -> (i32, i32) {
    %c0_i32 = arith.constant 0 : i32
    %c0_i32_0 = arith.constant 0 : i32
    %c0_i32_1 = arith.constant 0 : i32
    return %c0_i32, %c0_i32_0 : i32, i32
  }
  func.func @transform_8(%arg0: i32) -> (i32, i32) {
    %c0_i32 = arith.constant 0 : i32
    %c0_i32_0 = arith.constant 0 : i32
    %c0_i32_1 = arith.constant 0 : i32
    return %c0_i32, %c0_i32_0 : i32, i32
  }
  func.func @transform_9(%arg0: i32) -> (i32, i32) {
    %c0_i32 = arith.constant 0 : i32
    %c0_i32_0 = arith.constant 0 : i32
    %c0_i32_1 = arith.constant 0 : i32
    return %c0_i32, %c0_i32_0 : i32, i32
  }
  func.func @transform_10(%arg0: i32) -> (i32, i32) {
    %c0_i32 = arith.constant 0 : i32
    %c0_i32_0 = arith.constant 0 : i32
    %c0_i32_1 = arith.constant 0 : i32
    return %c0_i32, %c0_i32_0 : i32, i32
  }
  func.func @transform_11(%arg0: i32) -> (i32, i32) {
    %c0_i32 = arith.constant 0 : i32
    %c0_i32_0 = arith.constant 0 : i32
    return %arg0, %c0_i32 : i32, i32
  }
}

</mosaic_0001>

<llo_original>
// kernel: deepset_forward.1
$region0: #{deepset_forward.1}
  #allocation0 [shape = 'u32[]', space=smem, size = 0x4, offset = 0x4, fixed_abs, tag = 'smem constant byte address 0x4 - core index']
  #allocation1 [shape = 'u32[144,128]{1,0:T(1,128)}', space=vmem, size = 0x12000, scoped, tag = 'internal scratch']
  #allocation2 [shape = 'f32[1,1]{1,0:T(1,128)S(1)}', space=vmem, size = 0x200, scoped, tag = 'scoped memory for deepset_forward.1']
  %s0 = inlined_call_operand.vmem [shape: bf16[16,27], index: 0, kind: input, shape index: {}]
  %s1 = inlined_call_operand.vmem [shape: bf16[27,64], index: 1, kind: input, shape index: {}]
  %s2 = inlined_call_operand.vmem [shape: f32[1,64], index: 2, kind: input, shape index: {}]
  %s3 = inlined_call_operand.vmem [shape: bf16[64,32], index: 3, kind: input, shape index: {}]
  %s4 = inlined_call_operand.vmem [shape: f32[1,32], index: 4, kind: input, shape index: {}]
  %s5 = inlined_call_operand.vmem [shape: bf16[32,32], index: 5, kind: input, shape index: {}]
  %s6 = inlined_call_operand.vmem [shape: f32[1,32], index: 6, kind: input, shape index: {}]
  %s7 = inlined_call_operand.vmem [shape: f32[1,100], index: 7, kind: input, shape index: {}]
  %s8 = inlined_call_operand.vmem [shape: f32[1,100], index: 8, kind: input, shape index: {}]
  %s9 = inlined_call_operand.vmem [shape: f32[1,100], index: 9, kind: input, shape index: {}]
  %s10 = inlined_call_operand.<no memory space> [shape: f32[1,1], index: 10, kind: input, shape index: {}]
  %s11 = inlined_call_operand.vmem [shape: f32[16,2], index: 11, kind: output, shape index: {}]
  %s12 = sld [smem:[#allocation0]]
  $region54: #{deepset_forward.1} parent=0
    _
  %s14 = ssub.s32 1, %s12
  %s15 = scalar_select 0, %s14, %s12
  %v16 = vstv %s10
  %17 = vst [vmem:[#allocation2] sm:$0x1] %v16
  // Predicated region
  $region2: #{deepset_forward.1} parent=0 // pred_check
    _
  $region3: #{deepset_forward.1} parent=0 // pred_check_branch
    %19 = sbr.rel (0) target = $region5
  $region4: #{deepset_forward.1} parent=0 // pred_region
    _
  $region5: #{deepset_forward.1} parent=0 // pred_fallthru
    _
  // Predicated region
  $region6: #{deepset_forward.1} parent=0 // pred_check
    _
  $region7: #{deepset_forward.1} parent=0 // pred_check_branch
    %21 = sbr.rel (0) target = $region9
  $region8: #{deepset_forward.1} parent=0 // pred_region
    _
  $region9: #{deepset_forward.1} parent=0 // pred_fallthru
    _
  // Predicated region
  $region10: #{deepset_forward.1} parent=0 // pred_check
    _
  $region11: #{deepset_forward.1} parent=0 // pred_check_branch
    %23 = sbr.rel (0) target = $region13
  $region12: #{deepset_forward.1} parent=0 // pred_region
    _
  $region13: #{deepset_forward.1} parent=0 // pred_fallthru
    _
  // Predicated region
  $region14: #{deepset_forward.1} parent=0 // pred_check
    _
  $region15: #{deepset_forward.1} parent=0 // pred_check_branch
    %25 = sbr.rel (0) target = $region17
  $region16: #{deepset_forward.1} parent=0 // pred_region
    _
  $region17: #{deepset_forward.1} parent=0 // pred_fallthru
    _
  // Predicated region
  $region18: #{deepset_forward.1} parent=0 // pred_check
    _
  $region19: #{deepset_forward.1} parent=0 // pred_check_branch
    %27 = sbr.rel (0) target = $region21
  $region20: #{deepset_forward.1} parent=0 // pred_region
    _
  $region21: #{deepset_forward.1} parent=0 // pred_fallthru
    _
  // Predicated region
  $region22: #{deepset_forward.1} parent=0 // pred_check
    _
  $region23: #{deepset_forward.1} parent=0 // pred_check_branch
    %29 = sbr.rel (0) target = $region25
  $region24: #{deepset_forward.1} parent=0 // pred_region
    _
  $region25: #{deepset_forward.1} parent=0 // pred_fallthru
    _
  // Predicated region
  $region26: #{deepset_forward.1} parent=0 // pred_check
    _
  $region27: #{deepset_forward.1} parent=0 // pred_check_branch
    %31 = sbr.rel (0) target = $region29
  $region28: #{deepset_forward.1} parent=0 // pred_region
    _
  $region29: #{deepset_forward.1} parent=0 // pred_fallthru
    _
  // Predicated region
  $region30: #{deepset_forward.1} parent=0 // pred_check
    _
  $region31: #{deepset_forward.1} parent=0 // pred_check_branch
    %33 = sbr.rel (0) target = $region33
  $region32: #{deepset_forward.1} parent=0 // pred_region
    _
  $region33: #{deepset_forward.1} parent=0 // pred_fallthru
    _
  // Predicated region
  $region34: #{deepset_forward.1} parent=0 // pred_check
    _
  $region35: #{deepset_forward.1} parent=0 // pred_check_branch
    %35 = sbr.rel (0) target = $region37
  $region36: #{deepset_forward.1} parent=0 // pred_region
    _
  $region37: #{deepset_forward.1} parent=0 // pred_fallthru
    _
  // Predicated region
  $region38: #{deepset_forward.1} parent=0 // pred_check
    _
  $region39: #{deepset_forward.1} parent=0 // pred_check_branch
    %37 = sbr.rel (0) target = $region41
  $region40: #{deepset_forward.1} parent=0 // pred_region
    _
  $region41: #{deepset_forward.1} parent=0 // pred_fallthru
    _
  // Predicated region
  $region42: #{deepset_forward.1} parent=0 // pred_check
    _
  $region43: #{deepset_forward.1} parent=0 // pred_check_branch
    %39 = sbr.rel (0) target = $region45
  $region44: #{deepset_forward.1} parent=0 // pred_region
    _
  $region45: #{deepset_forward.1} parent=0 // pred_fallthru
    _
  %v41 = vld [vmem:[%s0] sm:$0xf]
  %v42 = vld [vmem:[%s0 + $0x4] sm:$0xf]
  %v43 = vld [vmem:[%s1] sm:$0xf]
  %v44 = vld [vmem:[%s1 + $0x4] sm:$0xf]
  %v45 = vld [vmem:[%s1 + $0x8] sm:$0xf]
  %v46 = vld [vmem:[%s1 + $0xc] sm:$0x3]
  %v47 = vld [vmem:[%s2] sm:$0x1]
  %v49 = vlaneseq
  %v50 = vshrl.u32 %v49, 7
  %v51 = vsub.s32 0, %v50
  %v52 = vrot.slane %v47, %v51
  %v56 = vunpack.c.l.b16 %v41
  %v57 = vunpack.c.l.b16 %v42
  %v58 = vpack.c.b16 %v57, %v56
  %v63 = vunpack.c.l.b16 %v43
  %v64 = vunpack.c.l.b16 %v44
  %v65 = vunpack.c.l.b16 %v45
  %v66 = vunpack.c.l.b16 %v46
  %v67 = vpack.c.b16 %v64, %v63
  %v68 = vpack.c.b16 %v66, %v65
  %vm70 = vcmask 220160
  %v72 = vsel %vm70, %v58, 0
  %vm74 = vcmask 1044480
  %vm75 = vcmask 1045504
  %v76 = vsel %vm74, 4294967295, 65535
  %v77 = vsel %vm75, %v76, 0
  %v79 = vand.u32 %v68, %v77
  %81 = vmatprep.subr.bf16.mxu0 0
  %82 = vmatpush1.bf16.msra.mxu0 %v67
  %83 = vmatprep.subr.bf16.mxu0 0
  %84 = vmatpush1.bf16.msra.mxu0 %v79
  %85 = vmatprep.subr.bf16.mxu0 0
  %86 = vmatpush1.bf16.msra.mxu0 0
  %87 = vmatprep.subr.bf16.mxu0 0
  %88 = vmatpush1.bf16.msra.mxu0 0
  %89 = vmatprep.subr.bf16.mxu0 0
  %90 = vmatpush1.bf16.msra.mxu0 0
  %91 = vmatprep.subr.bf16.mxu0 0
  %92 = vmatpush1.bf16.msra.mxu0 0
  %93 = vmatprep.subr.bf16.mxu0 0
  %94 = vmatpush1.bf16.msra.mxu0 0
  %95 = vmatprep.subr.bf16.mxu0 0
  %96 = vmatpush1.bf16.msra.mxu0 0
  %97 = vmatprep.subr.bf16.mxu0 0
  %98 = vmatpush1.bf16.msra.mxu0 0
  %99 = vmatprep.subr.bf16.mxu0 0
  %100 = vmatpush1.bf16.msra.mxu0 0
  %101 = vmatprep.subr.bf16.mxu0 0
  %102 = vmatpush1.bf16.msra.mxu0 0
  %103 = vmatprep.subr.bf16.mxu0 0
  %104 = vmatpush1.bf16.msra.mxu0 0
  %105 = vmatprep.subr.bf16.mxu0 0
  %106 = vmatpush1.bf16.msra.mxu0 0
  %107 = vmatprep.subr.bf16.mxu0 0
  %108 = vmatpush1.bf16.msra.mxu0 0
  %109 = vmatprep.subr.bf16.mxu0 0
  %110 = vmatpush1.bf16.msra.mxu0 0
  %111 = vmatprep.subr.bf16.mxu0 0
  %112 = vmatpush1.bf16.msra.mxu0 0
  %113 = vmatprep.mubr.bf16.mxu0 0
  %114 = vmatmul.mubr.bf16.gmra.mrb[0].mxu0 %v72
  %v115 = vpop.f32.mrb[0].mxu0
  %v116 = vadd.f32 %v52, %v115
  %v117 = vpop.f32.mrb[0].mxu0
  %v118 = vpop.f32.mrb[0].mxu0
  %v119 = vadd.f32 %v52, %v118
  %v120 = vpop.f32.mrb[0].mxu0
  %121 = vdwg.mxu0
  %v122 = vmax.f32 %v116, 0.0
  %v123 = vmax.f32 %v119, 0.0
  %v124 = vpack.c.bf16 %v123, %v122
  %v125 = vld [vmem:[%s3] sm:$0xf]
  %v126 = vld [vmem:[%s3 + $0x4] sm:$0xf]
  %v127 = vld [vmem:[%s3 + $0x8] sm:$0xf]
  %v128 = vld [vmem:[%s3 + $0xc] sm:$0xf]
  %v129 = vld [vmem:[%s3 + $0x10] sm:$0xf]
  %v130 = vld [vmem:[%s3 + $0x14] sm:$0xf]
  %v131 = vld [vmem:[%s3 + $0x18] sm:$0xf]
  %v132 = vld [vmem:[%s3 + $0x1c] sm:$0xf]
  %v133 = vld [vmem:[%s4] sm:$0x1]
  %v135 = vlaneseq
  %v136 = vshrl.u32 %v135, 7
  %v137 = vsub.s32 0, %v136
  %v138 = vrot.slane %v133, %v137
  %v148 = vunpack.c.l.b16 %v125
  %v149 = vunpack.c.l.b16 %v126
  %v150 = vunpack.c.l.b16 %v127
  %v151 = vunpack.c.l.b16 %v128
  %v152 = vunpack.c.l.b16 %v129
  %v153 = vunpack.c.l.b16 %v130
  %v154 = vunpack.c.l.b16 %v131
  %v155 = vunpack.c.l.b16 %v132
  %v156 = vpack.c.b16 %v149, %v148
  %v157 = vpack.c.b16 %v151, %v150
  %v158 = vpack.c.b16 %v153, %v152
  %v159 = vpack.c.b16 %v155, %v154
  %vm164 = vcmask 523264
  %v166 = vsel %vm164, %v124, 0
  %168 = vmatprep.subr.bf16.mxu0 0
  %169 = vmatpush1.bf16.msra.mxu0 %v156
  %170 = vmatprep.subr.bf16.mxu0 0
  %171 = vmatpush1.bf16.msra.mxu0 %v157
  %172 = vmatprep.subr.bf16.mxu0 0
  %173 = vmatpush1.bf16.msra.mxu0 %v158
  %174 = vmatprep.subr.bf16.mxu0 0
  %175 = vmatpush1.bf16.msra.mxu0 %v159
  %176 = vmatprep.subr.bf16.mxu0 0
  %177 = vmatpush1.bf16.msra.mxu0 0
  %178 = vmatprep.subr.bf16.mxu0 0
  %179 = vmatpush1.bf16.msra.mxu0 0
  %180 = vmatprep.subr.bf16.mxu0 0
  %181 = vmatpush1.bf16.msra.mxu0 0
  %182 = vmatprep.subr.bf16.mxu0 0
  %183 = vmatpush1.bf16.msra.mxu0 0
  %184 = vmatprep.subr.bf16.mxu0 0
  %185 = vmatpush1.bf16.msra.mxu0 0
  %186 = vmatprep.subr.bf16.mxu0 0
  %187 = vmatpush1.bf16.msra.mxu0 0
  %188 = vmatprep.subr.bf16.mxu0 0
  %189 = vmatpush1.bf16.msra.mxu0 0
  %190 = vmatprep.subr.bf16.mxu0 0
  %191 = vmatpush1.bf16.msra.mxu0 0
  %192 = vmatprep.subr.bf16.mxu0 0
  %193 = vmatpush1.bf16.msra.mxu0 0
  %194 = vmatprep.subr.bf16.mxu0 0
  %195 = vmatpush1.bf16.msra.mxu0 0
  %196 = vmatprep.subr.bf16.mxu0 0
  %197 = vmatpush1.bf16.msra.mxu0 0
  %198 = vmatprep.subr.bf16.mxu0 0
  %199 = vmatpush1.bf16.msra.mxu0 0
  %200 = vmatprep.mubr.bf16.mxu0 0
  %201 = vmatmul.mubr.bf16.gmra.mrb[0].mxu0 %v166
  %v202 = vpop.f32.mrb[0].mxu0
  %v203 = vadd.f32 %v138, %v202
  %v204 = vpop.f32.mrb[0].mxu0
  %v205 = vpop.f32.mrb[0].mxu0
  %v206 = vadd.f32 %v138, %v205
  %v207 = vpop.f32.mrb[0].mxu0
  %208 = vdwg.mxu0
  %v209 = vmax.f32 %v203, 0.0
  %v210 = vmax.f32 %v206, 0.0
  %v211 = vpack.c.bf16 %v210, %v209
  %v212 = vld [vmem:[%s5] sm:$0xf]
  %v213 = vld [vmem:[%s5 + $0x4] sm:$0xf]
  %v214 = vld [vmem:[%s5 + $0x8] sm:$0xf]
  %v215 = vld [vmem:[%s5 + $0xc] sm:$0xf]
  %v216 = vld [vmem:[%s6] sm:$0x1]
  %v218 = vlaneseq
  %v219 = vshrl.u32 %v218, 7
  %v220 = vsub.s32 0, %v219
  %v221 = vrot.slane %v216, %v220
  %v227 = vunpack.c.l.b16 %v212
  %v228 = vunpack.c.l.b16 %v213
  %v229 = vunpack.c.l.b16 %v214
  %v230 = vunpack.c.l.b16 %v215
  %v231 = vpack.c.b16 %v228, %v227
  %v232 = vpack.c.b16 %v230, %v229
  %vm235 = vcmask 261120
  %v237 = vsel %vm235, %v211, 0
  %239 = vmatprep.subr.bf16.mxu0 0
  %240 = vmatpush1.bf16.msra.mxu0 %v231
  %241 = vmatprep.subr.bf16.mxu0 0
  %242 = vmatpush1.bf16.msra.mxu0 %v232
  %243 = vmatprep.subr.bf16.mxu0 0
  %244 = vmatpush1.bf16.msra.mxu0 0
  %245 = vmatprep.subr.bf16.mxu0 0
  %246 = vmatpush1.bf16.msra.mxu0 0
  %247 = vmatprep.subr.bf16.mxu0 0
  %248 = vmatpush1.bf16.msra.mxu0 0
  %249 = vmatprep.subr.bf16.mxu0 0
  %250 = vmatpush1.bf16.msra.mxu0 0
  %251 = vmatprep.subr.bf16.mxu0 0
  %252 = vmatpush1.bf16.msra.mxu0 0
  %253 = vmatprep.subr.bf16.mxu0 0
  %254 = vmatpush1.bf16.msra.mxu0 0
  %255 = vmatprep.subr.bf16.mxu0 0
  %256 = vmatpush1.bf16.msra.mxu0 0
  %257 = vmatprep.subr.bf16.mxu0 0
  %258 = vmatpush1.bf16.msra.mxu0 0
  %259 = vmatprep.subr.bf16.mxu0 0
  %260 = vmatpush1.bf16.msra.mxu0 0
  %261 = vmatprep.subr.bf16.mxu0 0
  %262 = vmatpush1.bf16.msra.mxu0 0
  %263 = vmatprep.subr.bf16.mxu0 0
  %264 = vmatpush1.bf16.msra.mxu0 0
  %265 = vmatprep.subr.bf16.mxu0 0
  %266 = vmatpush1.bf16.msra.mxu0 0
  %267 = vmatprep.subr.bf16.mxu0 0
  %268 = vmatpush1.bf16.msra.mxu0 0
  %269 = vmatprep.subr.bf16.mxu0 0
  %270 = vmatpush1.bf16.msra.mxu0 0
  %271 = vmatprep.mubr.bf16.mxu0 0
  %272 = vmatmul.mubr.bf16.gmra.mrb[0].mxu0 %v237
  %v273 = vpop.f32.mrb[0].mxu0
  %v274 = vadd.f32 %v221, %v273
  %v275 = vpop.f32.mrb[0].mxu0
  %v276 = vpop.f32.mrb[0].mxu0
  %v277 = vadd.f32 %v221, %v276
  %v278 = vpop.f32.mrb[0].mxu0
  %279 = vdwg.mxu0
  %v280 = vmax.f32 %v274, 0.0
  %v281 = vmax.f32 %v277, 0.0
  %v282 = vsel %vm235, %v280, 0.0
  %283 = vadd.xlane.f32.xlu0 %v282
  %v284 = vpop.xlane.xlu0 %283
  %v285 = vsel %vm235, %v281, 0.0
  %286 = vadd.xlane.f32.xlu0 %v285
  %v287 = vpop.xlane.xlu0 %286
  %v288 = vrcp.pop 32.0
  %v289 = vmul.f32 %v284, %v288
  %v290 = vmul.f32 %v287, %v288
  %v291 = vld [vmem:[%s7] sm:$0x1]
  %v293 = vlaneseq
  %v294 = vshrl.u32 %v293, 7
  %v295 = vsub.s32 0, %v294
  %v296 = vrot.slane %v291, %v295
  %v298 = vmul.f32 %v289, %v296
  %v299 = vmul.f32 %v290, %v296
  %v300 = vld [vmem:[%s8] sm:$0x1]
  %v302 = vlaneseq
  %v303 = vshrl.u32 %v302, 7
  %v304 = vsub.s32 0, %v303
  %v305 = vrot.slane %v300, %v304
  %v307 = vadd.f32 %v298, %v305
  %v308 = vadd.f32 %v299, %v305
  %v309 = vmax.f32 %v307, 0.0
  %v310 = vmax.f32 %v308, 0.0
  %v311 = vld [vmem:[%s9] sm:$0x1]
  %v313 = vlaneseq
  %v314 = vshrl.u32 %v313, 7
  %v315 = vsub.s32 0, %v314
  %v316 = vrot.slane %v311, %v315
  %v318 = vmul.f32 %v309, %v316
  %v319 = vmul.f32 %v310, %v316
  %vm320 = vcmask 818176
  %v321 = vsel %vm320, %v318, 0.0
  %322 = vadd.xlane.f32.xlu0 %v321
  %v323 = vpop.xlane.xlu0 %322
  %v324 = vsel %vm320, %v319, 0.0
  %325 = vadd.xlane.f32.xlu0 %v324
  %v326 = vpop.xlane.xlu0 %325
  %v327 = vld [vmem:[#allocation2] sm:$0x1]
  %v329 = vlaneseq
  %v330 = vshrl.u32 %v329, 7
  %v331 = vsub.s32 0, %v330
  %v332 = vrot.slane %v327, %v331
  %v334 = vadd.f32 %v323, %v332
  %v335 = vadd.f32 %v326, %v332
  %v336 = vsub.f32 0.0, %v334
  %v337 = vsub.f32 0.0, %v335
  %v338 = vmul.f32 %v336, 1.442695
  %v339 = vpow.pop %v338
  %v340 = vmul.f32 %v337, 1.442695
  %v341 = vpow.pop %v340
  %v342 = vadd.f32 %v339, 1.0
  %v343 = vadd.f32 %v341, 1.0
  %v344 = vrcp.pop %v342
  %v345 = vrcp.pop %v343
  %vm346 = vcmask 7168
  %347 = vst.msk [vmem:[%s11] sm:$0xff] %vm346, %v344
  %348 = vst.msk [vmem:[%s11 + $0x8] sm:$0xff] %vm346, %v345
  %v349 = vsub.f32 1.0, %v344
  %v350 = vsub.f32 1.0, %v345
  %353 = vrot.lane.b32.xlu0 %v349, 1
  %v354 = vpop.permute.xlu0 %353
  %355 = vrot.lane.b32.xlu0 %v350, 1
  %v356 = vpop.permute.xlu0 %355
  %vm359 = vcmask 15368
  %360 = vst.msk [vmem:[%s11] sm:$0xff] %vm359, %v354
  %361 = vst.msk [vmem:[%s11 + $0x8] sm:$0xff] %vm359, %v356
  // Predicated region
  $region46: #{deepset_forward.1} parent=0 // pred_check
    _
  $region47: #{deepset_forward.1} parent=0 // pred_check_branch
    %363 = sbr.rel (0) target = $region49
  $region48: #{deepset_forward.1} parent=0 // pred_region
    _
  $region49: #{deepset_forward.1} parent=0 // pred_fallthru
    _
  // Predicated region
  $region50: #{deepset_forward.1} parent=0 // pred_check
    _
  $region51: #{deepset_forward.1} parent=0 // pred_check_branch
    %365 = sbr.rel (0) target = $region53
  $region52: #{deepset_forward.1} parent=0 // pred_region
    _
  $region53: #{deepset_forward.1} parent=0 // pred_fallthru
    _

</llo_original>
